<compile_context>
chip_gen: v5e
topology: v5e:2x2
jax: 0.10.0
libtpu: 0.0.40
codegen_flags: <defaults>
</compile_context>

<pallas_src>
import functools

import jax
import jax.numpy as jnp
from jax.experimental import pallas as pl
from jax.experimental.pallas import tpu as pltpu

_LANE = 128
_BLOCK_ROWS = 1024   # 1024 x 128 x 4B = 512 KiB per f32 block per input


def _patchgan_loss_kernel(real_ref, fake_ref, out_ref, acc_r, acc_f, *,
                          n_real, n_fake, w_real, w_fake, br, bf):
    step = pl.program_id(0)

    @pl.when(step == 0)
    def _init():
        acc_r[...] = jnp.zeros_like(acc_r)
        acc_f[...] = jnp.zeros_like(acc_f)

    def masked_softplus(ref, rows, n, negate):
        x = ref[...].astype(jnp.float32)
        if negate:          # softplus(-x) for the "real" branch (target = 1)
            x = -x
        # Numerically stable softplus(x) = max(x, 0) + log1p(exp(-|x|))
        sp = jnp.maximum(x, 0.0) + jnp.log1p(jnp.exp(-jnp.abs(x)))
        # Global element index of each lane; anything >= n is lane padding or
        # an out-of-range (clamped / partial) block and must contribute 0.
        row = jax.lax.broadcasted_iota(jnp.int32, (rows, _LANE), 0) + step * rows
        col = jax.lax.broadcasted_iota(jnp.int32, (rows, _LANE), 1)
        gidx = row * _LANE + col
        return jnp.where(gidx < n, sp, 0.0)

    acc_r[...] += masked_softplus(real_ref, br, n_real, negate=True)
    acc_f[...] += masked_softplus(fake_ref, bf, n_fake, negate=False)

    @pl.when(step == pl.num_programs(0) - 1)
    def _finalize():
        out_ref[0, 0] = (jnp.sum(acc_r[...]) * w_real
                         + jnp.sum(acc_f[...]) * w_fake)


def _to_slab(x):
    """Flatten to a (rows, 128) lane-dense slab of the *native* dtype.

    Adds at most a 127-element pad when numel is not a multiple of 128; padded
    lanes are masked out inside the kernel.
    """
    n = x.size
    flat = x.reshape(-1)
    rem = (-n) % _LANE
    if rem:
        flat = jnp.pad(flat, (0, rem))
    rows = (n + rem) // _LANE
    return flat.reshape(rows, _LANE), n, rows


def _clamped_row_map(n_blocks):
    # Clamp the block index so a shorter input never DMAs out of bounds when
    # the grid is sized for the longer one; clamped blocks are fully masked.
    def index_map(i):
        return (jnp.minimum(i, n_blocks - 1), 0)
    return index_map


@jax.jit
def patchgan_loss(real_preds, fake_preds):
    real_slab, n_real, rows_r = _to_slab(real_preds)
    fake_slab, n_fake, rows_f = _to_slab(fake_preds)

    br = min(_BLOCK_ROWS, rows_r)
    bf = min(_BLOCK_ROWS, rows_f)
    nblk_r = pl.cdiv(rows_r, br)
    nblk_f = pl.cdiv(rows_f, bf)
    num_steps = max(nblk_r, nblk_f)

    kernel = functools.partial(
        _patchgan_loss_kernel,
        n_real=n_real, n_fake=n_fake,
        w_real=0.5 / n_real, w_fake=0.5 / n_fake,
        br=br, bf=bf,
    )

    # TODO(synk): optional v7x-only win: leading size-2 "parallel" grid axis to
    # split the reduction across both TensorCores (no effect on v5e/v6e).
    out = pl.pallas_call(
        kernel,
        out_shape=jax.ShapeDtypeStruct((1, 1), jnp.float32),
        grid=(num_steps,),
        in_specs=[
            pl.BlockSpec((br, _LANE), _clamped_row_map(nblk_r)),
            pl.BlockSpec((bf, _LANE), _clamped_row_map(nblk_f)),
        ],
        out_specs=pl.BlockSpec(memory_space=pltpu.SMEM),
        scratch_shapes=[
            pltpu.VMEM((br, _LANE), jnp.float32),
            pltpu.VMEM((bf, _LANE), jnp.float32),
        ],
        compiler_params=pltpu.CompilerParams(
            dimension_semantics=("arbitrary",)),
    )(real_slab, fake_slab)
    return out[0, 0]


def _reference_loss(real_preds, fake_preds):
    r = real_preds.astype(jnp.float32)
    f = fake_preds.astype(jnp.float32)
    real_loss = jnp.mean(jnp.maximum(-r, 0.0) + jnp.log1p(jnp.exp(-jnp.abs(r))))
    fake_loss = jnp.mean(jnp.maximum(f, 0.0) + jnp.log1p(jnp.exp(-jnp.abs(f))))
    return (real_loss + fake_loss) * 0.5


if __name__ == "__main__":
    key = jax.random.PRNGKey(0)
    k1, k2, k3, k4 = jax.random.split(key, 4)

    # Typical PatchGAN discriminator maps (NCHW, 1 channel).
    real_a = jax.random.normal(k1, (2, 1, 16, 16), dtype=jnp.float32)
    fake_a = jax.random.normal(k2, (2, 1, 16, 16), dtype=jnp.float32)
    loss_a = jax.block_until_ready(patchgan_loss(real_a, fake_a))
    ref_a = _reference_loss(real_a, fake_a)
    assert jnp.allclose(loss_a, ref_a, rtol=1e-5, atol=1e-6), (loss_a, ref_a)

    # Ragged size (numel not a multiple of 128) exercises the in-kernel mask.
    real_b = jax.random.normal(k3, (2, 1, 30, 30), dtype=jnp.float32)
    fake_b = jax.random.normal(k4, (2, 1, 30, 30), dtype=jnp.float32)
    loss_b = jax.block_until_ready(patchgan_loss(real_b, fake_b))
    ref_b = _reference_loss(real_b, fake_b)
    assert jnp.allclose(loss_b, ref_b, rtol=1e-5, atol=1e-6), (loss_b, ref_b)

    print("KERNEL_OK")
</pallas_src>

<mosaic_0001>
module attributes {stable_mosaic.version = 11 : i64} {
  func.func @_patchgan_loss_kernel(%arg0: i32, %arg1: memref<4x128xf32, #tpu.memory_space<vmem>>, %arg2: memref<4x128xf32, #tpu.memory_space<vmem>>, %arg3: memref<1x1xf32, #tpu.memory_space<smem>>, %arg4: memref<4x128xf32, #tpu.memory_space<vmem>>, %arg5: memref<4x128xf32, #tpu.memory_space<vmem>>) attributes {dimension_semantics = [#tpu.dimension_semantics<arbitrary>], iteration_bounds = array<i64: 1>, scalar_prefetch = 0 : i64, scratch_operands = 2 : i64, tpu.core_type = #tpu.core_type<tc>, window_params = [{transform_indices = @transform_0, window_bounds = array<i64: 4, 128>}, {transform_indices = @transform_1, window_bounds = array<i64: 4, 128>}, {transform_indices = @transform_2, window_bounds = array<i64: 1, 1>}]} {
    %c0_i32 = arith.constant 0 : i32
    %0 = arith.cmpi eq, %arg0, %c0_i32 : i32
    %1 = arith.extui %0 : i1 to i32
    %c0_i32_0 = arith.constant 0 : i32
    %2 = arith.cmpi ne, %1, %c0_i32_0 : i32
    scf.if %2 {
      %cst_23 = arith.constant 0.000000e+00 : f32
      %56 = vector.broadcast %cst_23 : f32 to vector<4x128xf32>
      %c0_24 = arith.constant 0 : index
      %c0_25 = arith.constant 0 : index
      %57 = vector.load %arg4[%c0_24, %c0_25] : memref<4x128xf32, #tpu.memory_space<vmem>>, vector<4x128xf32>
      tpu.vector_store %arg4[%c0_24, %c0_25], %56 {strides = array<i32>} : memref<4x128xf32, #tpu.memory_space<vmem>>, vector<4x128xf32>,
      %cst_26 = arith.constant 0.000000e+00 : f32
      %58 = vector.broadcast %cst_26 : f32 to vector<4x128xf32>
      %c0_27 = arith.constant 0 : index
      %c0_28 = arith.constant 0 : index
      %59 = vector.load %arg5[%c0_27, %c0_28] : memref<4x128xf32, #tpu.memory_space<vmem>>, vector<4x128xf32>
      tpu.vector_store %arg5[%c0_27, %c0_28], %58 {strides = array<i32>} : memref<4x128xf32, #tpu.memory_space<vmem>>, vector<4x128xf32>,
    } else {
    }
    %c0 = arith.constant 0 : index
    %c0_1 = arith.constant 0 : index
    %3 = vector.load %arg4[%c0, %c0_1] : memref<4x128xf32, #tpu.memory_space<vmem>>, vector<4x128xf32>
    %c0_2 = arith.constant 0 : index
    %c0_3 = arith.constant 0 : index
    %4 = vector.load %arg1[%c0_2, %c0_3] : memref<4x128xf32, #tpu.memory_space<vmem>>, vector<4x128xf32>
    %cst = arith.constant 0.000000e+00 : f32
    %5 = vector.broadcast %cst : f32 to vector<4x128xf32>
    %6 = arith.subf %5, %4 : vector<4x128xf32>
    %cst_4 = arith.constant 0.000000e+00 : f32
    %7 = vector.broadcast %cst_4 : f32 to vector<4x128xf32>
    %8 = arith.maximumf %6, %7 : vector<4x128xf32>
    %9 = math.absf %6 : vector<4x128xf32>
    %cst_5 = arith.constant 0.000000e+00 : f32
    %10 = vector.broadcast %cst_5 : f32 to vector<4x128xf32>
    %11 = arith.subf %10, %9 : vector<4x128xf32>
    %12 = math.exp %11 : vector<4x128xf32>
    %13 = math.log1p %12 : vector<4x128xf32>
    %14 = arith.addf %8, %13 : vector<4x128xf32>
    %15 = tpu.iota {dimensions = array<i32: 0>} : vector<4x128xi32>
    %c4_i32 = arith.constant 4 : i32
    %16 = arith.muli %arg0, %c4_i32 : i32
    %17 = vector.broadcast %16 : i32 to vector<4x128xi32>
    %18 = arith.addi %15, %17 : vector<4x128xi32>
    %19 = tpu.iota {dimensions = array<i32: 1>} : vector<4x128xi32>
    %c128_i32 = arith.constant 128 : i32
    %20 = vector.broadcast %c128_i32 : i32 to vector<4x128xi32>
    %21 = arith.muli %18, %20 : vector<4x128xi32>
    %22 = arith.addi %21, %19 : vector<4x128xi32>
    %c512_i32 = arith.constant 512 : i32
    %23 = vector.broadcast %c512_i32 : i32 to vector<4x128xi32>
    %24 = arith.cmpi slt, %22, %23 : vector<4x128xi32>
    %cst_6 = arith.constant 0.000000e+00 : f32
    %25 = vector.broadcast %cst_6 : f32 to vector<4x128xf32>
    %26 = arith.select %24, %14, %25 : vector<4x128xi1>, vector<4x128xf32>
    %27 = arith.addf %3, %26 : vector<4x128xf32>
    %c0_7 = arith.constant 0 : index
    %c0_8 = arith.constant 0 : index
    %28 = vector.load %arg4[%c0_7, %c0_8] : memref<4x128xf32, #tpu.memory_space<vmem>>, vector<4x128xf32>
    tpu.vector_store %arg4[%c0_7, %c0_8], %27 {strides = array<i32>} : memref<4x128xf32, #tpu.memory_space<vmem>>, vector<4x128xf32>,
    %c0_9 = arith.constant 0 : index
    %c0_10 = arith.constant 0 : index
    %29 = vector.load %arg5[%c0_9, %c0_10] : memref<4x128xf32, #tpu.memory_space<vmem>>, vector<4x128xf32>
    %c0_11 = arith.constant 0 : index
    %c0_12 = arith.constant 0 : index
    %30 = vector.load %arg2[%c0_11, %c0_12] : memref<4x128xf32, #tpu.memory_space<vmem>>, vector<4x128xf32>
    %cst_13 = arith.constant 0.000000e+00 : f32
    %31 = vector.broadcast %cst_13 : f32 to vector<4x128xf32>
    %32 = arith.maximumf %30, %31 : vector<4x128xf32>
    %33 = math.absf %30 : vector<4x128xf32>
    %cst_14 = arith.constant 0.000000e+00 : f32
    %34 = vector.broadcast %cst_14 : f32 to vector<4x128xf32>
    %35 = arith.subf %34, %33 : vector<4x128xf32>
    %36 = math.exp %35 : vector<4x128xf32>
    %37 = math.log1p %36 : vector<4x128xf32>
    %38 = arith.addf %32, %37 : vector<4x128xf32>
    %39 = tpu.iota {dimensions = array<i32: 0>} : vector<4x128xi32>
    %c4_i32_15 = arith.constant 4 : i32
    %40 = arith.muli %arg0, %c4_i32_15 : i32
    %41 = vector.broadcast %40 : i32 to vector<4x128xi32>
    %42 = arith.addi %39, %41 : vector<4x128xi32>
    %43 = tpu.iota {dimensions = array<i32: 1>} : vector<4x128xi32>
    %c128_i32_16 = arith.constant 128 : i32
    %44 = vector.broadcast %c128_i32_16 : i32 to vector<4x128xi32>
    %45 = arith.muli %42, %44 : vector<4x128xi32>
    %46 = arith.addi %45, %43 : vector<4x128xi32>
    %c512_i32_17 = arith.constant 512 : i32
    %47 = vector.broadcast %c512_i32_17 : i32 to vector<4x128xi32>
    %48 = arith.cmpi slt, %46, %47 : vector<4x128xi32>
    %cst_18 = arith.constant 0.000000e+00 : f32
    %49 = vector.broadcast %cst_18 : f32 to vector<4x128xf32>
    %50 = arith.select %48, %38, %49 : vector<4x128xi1>, vector<4x128xf32>
    %51 = arith.addf %29, %50 : vector<4x128xf32>
    %c0_19 = arith.constant 0 : index
    %c0_20 = arith.constant 0 : index
    %52 = vector.load %arg5[%c0_19, %c0_20] : memref<4x128xf32, #tpu.memory_space<vmem>>, vector<4x128xf32>
    tpu.vector_store %arg5[%c0_19, %c0_20], %51 {strides = array<i32>} : memref<4x128xf32, #tpu.memory_space<vmem>>, vector<4x128xf32>,
    %c0_i32_21 = arith.constant 0 : i32
    %53 = arith.cmpi eq, %arg0, %c0_i32_21 : i32
    %54 = arith.extui %53 : i1 to i32
    %c0_i32_22 = arith.constant 0 : i32
    %55 = arith.cmpi ne, %54, %c0_i32_22 : i32
    scf.if %55 {
      %c0_23 = arith.constant 0 : index
      %c0_24 = arith.constant 0 : index
      %56 = vector.load %arg4[%c0_23, %c0_24] : memref<4x128xf32, #tpu.memory_space<vmem>>, vector<4x128xf32>
      %57 = vector.shape_cast %56 : vector<4x128xf32> to vector<1x4x128xf32>
      %cst_25 = arith.constant dense<0.000000e+00> : vector<1xf32>
      %58 = vector.multi_reduction <add>, %57, %cst_25 [1, 2] : vector<1x4x128xf32> to vector<1xf32>
      %59 = vector.shape_cast %58 : vector<1xf32> to vector<1x1x1xf32>
      %60 = vector.extract %59[0, 0, 0] : f32 from vector<1x1x1xf32>
      %cst_26 = arith.constant 9.765625E-4 : f32
      %61 = arith.mulf %60, %cst_26 : f32
      %c0_27 = arith.constant 0 : index
      %c0_28 = arith.constant 0 : index
      %62 = vector.load %arg5[%c0_27, %c0_28] : memref<4x128xf32, #tpu.memory_space<vmem>>, vector<4x128xf32>
      %63 = vector.shape_cast %62 : vector<4x128xf32> to vector<1x4x128xf32>
      %cst_29 = arith.constant dense<0.000000e+00> : vector<1xf32>
      %64 = vector.multi_reduction <add>, %63, %cst_29 [1, 2] : vector<1x4x128xf32> to vector<1xf32>
      %65 = vector.shape_cast %64 : vector<1xf32> to vector<1x1x1xf32>
      %66 = vector.extract %65[0, 0, 0] : f32 from vector<1x1x1xf32>
      %cst_30 = arith.constant 9.765625E-4 : f32
      %67 = arith.mulf %66, %cst_30 : f32
      %68 = arith.addf %61, %67 : f32
      %c0_31 = arith.constant 0 : index
      %c0_32 = arith.constant 0 : index
      %69 = memref.load %arg3[%c0_31, %c0_32] : memref<1x1xf32, #tpu.memory_space<smem>>
      memref.store %68, %arg3[%c0_31, %c0_32] : memref<1x1xf32, #tpu.memory_space<smem>>
    } else {
    }
    return
  }
  func.func @transform_0(%arg0: i32) -> (i32, i32) {
    %c0_i32 = arith.constant 0 : i32
    %0 = arith.minsi %arg0, %c0_i32 : i32
    %c0_i32_0 = arith.constant 0 : i32
    %c0_i32_1 = arith.constant 0 : i32
    return %0, %c0_i32_0 : i32, i32
  }
  func.func @transform_1(%arg0: i32) -> (i32, i32) {
    %c0_i32 = arith.constant 0 : i32
    %0 = arith.minsi %arg0, %c0_i32 : i32
    %c0_i32_0 = arith.constant 0 : i32
    %c0_i32_1 = arith.constant 0 : i32
    return %0, %c0_i32_0 : i32, i32
  }
  func.func @transform_2(%arg0: i32) -> (i32, i32) {
    %c0_i32 = arith.constant 0 : i32
    %c0_i32_0 = arith.constant 0 : i32
    %c0_i32_1 = arith.constant 0 : i32
    return %c0_i32, %c0_i32_0 : i32, i32
  }
}

</mosaic_0001>

<llo_original>
// kernel: patchgan_loss.1
$region0: #{patchgan_loss.1}
  #allocation0 [shape = 'u32[]', space=smem, size = 0x4, offset = 0x4, fixed_abs, tag = 'smem constant byte address 0x4 - core index']
  #allocation1 [shape = 'u32[72,128]{1,0:T(1,128)}', space=vmem, size = 0x9000, scoped, tag = 'internal scratch']
  #allocation2 [shape = 'f32[4,128]{1,0:T(4,128)}', space=vmem, size = 0x800, scoped, tag = 'scratch operand']
  #allocation3 [shape = 'f32[4,128]{1,0:T(4,128)}', space=vmem, size = 0x800, scoped, tag = 'scratch operand']
  %s0 = inlined_call_operand.vmem [shape: f32[4,128], index: 0, kind: input, shape index: {}]
  %s1 = inlined_call_operand.vmem [shape: f32[4,128], index: 1, kind: input, shape index: {}]
  %s2 = inlined_call_operand.hbm [shape: f32[1,1], index: 2, kind: output, shape index: {}]
  %s3 = sld [smem:[#allocation0]]
  $region26: #{patchgan_loss.1} parent=0
    _
  %s5 = ssub.s32 1, %s3
  %s6 = scalar_select 0, %s5, %s3
  $region1: #{patchgan_loss.1} parent=0
    #allocation4 [shape = 'u8[512]{0}', space=smem, size = 0x200, scoped, tag = 'output window, operand 0, single buffered']
    #allocation5 [shape = 's32[1]{0}', space=sflag, size = 0x4, scoped, tag = 'scoped memory for patchgan_loss.1']
    %7 = vsyncpa [#allocation5], 0
    // Predicated region
    $region2: #{patchgan_loss.1} parent=1 // pred_check
      _
    $region3: #{patchgan_loss.1} parent=1 // pred_check_branch
      %9 = sbr.rel (0) target = $region5
    $region4: #{patchgan_loss.1} parent=1 // pred_region
      _
    $region5: #{patchgan_loss.1} parent=1 // pred_fallthru
      _
    // Predicated region
    $region6: #{patchgan_loss.1} parent=1 // pred_check
      _
    $region7: #{patchgan_loss.1} parent=1 // pred_check_branch
      %11 = sbr.rel (0) target = $region9
    $region8: #{patchgan_loss.1} parent=1 // pred_region
      _
    $region9: #{patchgan_loss.1} parent=1 // pred_fallthru
      _
    %p12 = scmp.eq.s32.totalorder 0, 0
    // Predicated region
    $region10: #{patchgan_loss.1} parent=1 // pred_check
      %p13 = pneg %p12
    $region11: #{patchgan_loss.1} parent=1 // pred_check_branch
      %15 = sbr.rel (%p13) target = $region13
    $region12: #{patchgan_loss.1} parent=1 // pred_region
      %16 = vst [vmem:[#allocation2] sm:$0xf] 0.0
      %17 = vst [vmem:[#allocation3] sm:$0xf] 0.0
    $region13: #{patchgan_loss.1} parent=1 // pred_fallthru
      _
    %v18 = vld [vmem:[#allocation2] sm:$0xf]
    %v19 = vld [vmem:[%s0] sm:$0xf]
    %v20 = vsub.f32 0.0, %v19
    %v21 = vmax.f32 %v20, 0.0
    %v22 = vand.u32 2147483647, %v20
    %v23 = vsub.f32 0.0, %v22
    %v24 = vmul.f32 %v23, 1.442695
    %v25 = vpow.pop %v24
    %v26 = vadd.f32 %v25, 1.0
    %v27 = vlog2.pop %v26
    %v28 = vmul.f32 %v27, 0.6931472
    %v29 = vmul.f32 -0.5, %v25
    %v30 = vadd.f32 %v29, 1.0
    %v31 = vmul.f32 %v30, %v25
    %v32 = vand.u32 2147483647, %v25
    %vm33 = vcmp.lt.f32.partialorder %v32, 0.0004427343
    %v34 = vsel %vm33, %v31, %v28
    %v35 = vadd.f32 %v21, %v34
    %v36 = vlaneseq
    %v37 = vshrl.u32 %v36, 7
    %s38 = smul.u32 0, 4
    %v39 = vstv %s38
    %v40 = vadd.s32 %v37, %v39
    %v41 = vlaneseq
    %v42 = vand.u32 %v41, 127
    %v43 = vmul.u32 %v40, 128
    %v44 = vadd.s32 %v43, %v42
    %vm45 = vcmp.lt.s32.totalorder %v44, 512
    %v46 = vsel %vm45, %v35, 0.0
    %v47 = vadd.f32 %v18, %v46
    %48 = vst [vmem:[#allocation2] sm:$0xf] %v47
    %v49 = vld [vmem:[#allocation3] sm:$0xf]
    %v50 = vld [vmem:[%s1] sm:$0xf]
    %v51 = vmax.f32 %v50, 0.0
    %v52 = vand.u32 2147483647, %v50
    %v53 = vsub.f32 0.0, %v52
    %v54 = vmul.f32 %v53, 1.442695
    %v55 = vpow.pop %v54
    %v56 = vadd.f32 %v55, 1.0
    %v57 = vlog2.pop %v56
    %v58 = vmul.f32 %v57, 0.6931472
    %v59 = vmul.f32 -0.5, %v55
    %v60 = vadd.f32 %v59, 1.0
    %v61 = vmul.f32 %v60, %v55
    %v62 = vand.u32 2147483647, %v55
    %vm63 = vcmp.lt.f32.partialorder %v62, 0.0004427343
    %v64 = vsel %vm63, %v61, %v58
    %v65 = vadd.f32 %v51, %v64
    %v66 = vsel %vm45, %v65, 0.0
    %v67 = vadd.f32 %v49, %v66
    %68 = vst [vmem:[#allocation3] sm:$0xf] %v67
    // Predicated region
    $region14: #{patchgan_loss.1} parent=1 // pred_check
      %p69 = pneg %p12
    $region15: #{patchgan_loss.1} parent=1 // pred_check_branch
      %71 = sbr.rel (%p69) target = $region17
    $region16: #{patchgan_loss.1} parent=1 // pred_region
      %v72 = vld [vmem:[#allocation2] sm:$0xf]
      %vm73 = vcmask 1043456
      %v74 = vsel %vm73, %v72, 0.0
      %75 = vadd.xlane.f32.xlu0 %v74
      %v76 = vpop.xlane.xlu0 %75
      %v77 = vrot.slane %v76, 4
      %v78 = vadd.f32 %v76, %v77
      %v79 = vrot.slane %v78, 2
      %v80 = vadd.f32 %v78, %v79
      %v81 = vrot.slane %v80, 1
      %v82 = vadd.f32 %v80, %v81
      %s83 = vtos %v82
      %s84 = smul.f32 %s83, 0.0009765625
      %v85 = vld [vmem:[#allocation3] sm:$0xf]
      %v86 = vsel %vm73, %v85, 0.0
      %87 = vadd.xlane.f32.xlu0 %v86
      %v88 = vpop.xlane.xlu0 %87
      %v89 = vrot.slane %v88, 4
      %v90 = vadd.f32 %v88, %v89
      %v91 = vrot.slane %v90, 2
      %v92 = vadd.f32 %v90, %v91
      %v93 = vrot.slane %v92, 1
      %v94 = vadd.f32 %v92, %v93
      %s95 = vtos %v94
      %s96 = smul.f32 %s95, 0.0009765625
      %s97 = sadd.f32 %s84, %s96
      %s98 = scalar_lea.smem [#allocation4], 0
      %99 = sst [smem:[%s98]] %s97
    $region17: #{patchgan_loss.1} parent=1 // pred_fallthru
      _
    // Predicated region
    $region18: #{patchgan_loss.1} parent=1 // pred_check
      _
    $region19: #{patchgan_loss.1} parent=1 // pred_check_branch
      %101 = sbr.rel (0) target = $region21
    $region20: #{patchgan_loss.1} parent=1 // pred_region
      %103 = vsyncadd [#allocation5], 0
      %s105 = sshll.u32 %s2, 4
      %s106 = int_to_ptr.hbm [resolvable:$true] %s105
      %108 = dma.smem_to_hbm [#allocation4], 16, %s106, [#allocation5]
    $region21: #{patchgan_loss.1} parent=1 // pred_fallthru
      _
    // Predicated region
    $region22: #{patchgan_loss.1} parent=1 // pred_check
      _
    $region23: #{patchgan_loss.1} parent=1 // pred_check_branch
      %110 = sbr.rel (0) target = $region25
    $region24: #{patchgan_loss.1} parent=1 // pred_region
      %112 = dma.done [#allocation5], 16
    $region25: #{patchgan_loss.1} parent=1 // pred_fallthru
      _
    %113 = sfence
    %114 = vsyncpa [#allocation5], 1

</llo_original>
